<compile_context>
chip_gen: v7x
topology: tpu7x:2x2x1
jax: 0.10.0
libtpu: 0.0.40
codegen_flags: <defaults>
</compile_context>

<pallas_src>
import functools
import math

import jax
import jax.numpy as jnp
from jax import lax
from jax.experimental import pallas as pl
from jax.experimental.pallas import tpu as pltpu


def smha_kernel(q_in_ref, k_in_ref, v_in_ref, w_ref, b_ref, o_ref,
                stack_ref, attn_ref, *,
                batch, sq, sk, sv, d_model, n_hidden, n_output):
    nq, nk, nv = batch * sq, batch * sk, batch * sv
    d3 = 3 * d_model

    # ---- Stack [q_pad; k; v] into VMEM scratch (all offsets sublane-aligned).
    # Zero-fill first so q's padded fan-in columns are exact zeros (they meet
    # zero rows of wq in the packed weight, but NaN-safety needs real zeros).
    stack_ref[...] = jnp.zeros_like(stack_ref)
    stack_ref[0:nq, 0:n_hidden] = q_in_ref[...]
    stack_ref[nq:nq + nk, :] = k_in_ref[...]
    stack_ref[nq + nk:nq + nk + nv, :] = v_in_ref[...]

    # ---- One fused MXU call for all three projections.  The 1/sqrt(head_dim)
    # scale is already folded into the wq/bq block of the packed params.
    # Broadcasting the whole packed bias is correct because only the diagonal
    # blocks of `proj` are read below.
    proj = jnp.dot(stack_ref[...], w_ref[:, 0:d3],
                   preferred_element_type=jnp.float32) + b_ref[:, 0:d3]

    q = proj[0:nq, 0:d_model]                          # (B*Sq, D)
    k = proj[nq:nq + nk, d_model:2 * d_model]          # (B*Sk, D)
    v = proj[nq + nk:nq + nk + nv, 2 * d_model:d3]     # (B*Sv, D)

    # ---- Per-batch attention over the d_model axis (B is tiny -> unrolled).
    for b in range(batch):
        qb = q[b * sq:(b + 1) * sq, :]                 # (Sq, D) static slices
        kb = k[b * sk:(b + 1) * sk, :]                 # (Sk, D)
        vb = v[b * sv:(b + 1) * sv, :]                 # (Sv, D)

        # scores[i, j] = sum_s qb[s, i] * kb[s, j]  (scale pre-folded).
        # NOTE(perf): contraction over the leading (sublane) axis implies an
        # XLU transpose before the MXU; accepted since S=8 is tiny.
        scores = lax.dot_general(qb, kb, (((0,), (0,)), ((), ())),
                                 preferred_element_type=jnp.float32)   # (D, D)

        # Numerically-stable softmax with an exact divide.
        scores_max = jnp.max(scores, axis=-1, keepdims=True)
        unnorm = jnp.exp(scores - scores_max)
        probs = unnorm / jnp.sum(unnorm, axis=-1, keepdims=True)

        # attn[t, i] = sum_j probs[i, j] * vb[t, j] -> aligned scratch store.
        attn_ref[b * sv:(b + 1) * sv, :] = lax.dot_general(
            vb, probs, (((1,), (1,)), ((), ())),
            preferred_element_type=jnp.float32)

    # ---- Output projection: single MXU call off the attention scratch.
    out = jnp.dot(attn_ref[...], w_ref[:, d3:d3 + n_output],
                  preferred_element_type=jnp.float32) + b_ref[:, d3:d3 + n_output]
    o_ref[...] = out.astype(o_ref.dtype)


def spiking_mha_pallas(query, key, value, w_pack, b_pack):
    """query: (B,Sq,n_hidden_RNN); key/value: (B,S,D); packed params from
    pack_params().  Returns (B, Sv, n_output)."""
    B, Sq, H = query.shape
    _, Sk, D = key.shape
    _, Sv, _ = value.shape
    n_output = w_pack.shape[1] - 3 * D

    # Flatten batch+seq so the fused projection runs as one big MXU matmul.
    q2d = query.reshape(B * Sq, H)
    k2d = key.reshape(B * Sk, D)
    v2d = value.reshape(B * Sv, D)

    kernel = functools.partial(
        smha_kernel, batch=B, sq=Sq, sk=Sk, sv=Sv,
        d_model=D, n_hidden=H, n_output=n_output)

    vmem_spec = pl.BlockSpec(memory_space=pltpu.MemorySpace.VMEM)

    out2d = pl.pallas_call(
        kernel,
        out_shape=jax.ShapeDtypeStruct((B * Sv, n_output), query.dtype),
        # Single grid step: everything (< 100 KiB) lives in VMEM as whole,
        # un-blocked operands -> no per-step pipeline overhead, 5 input DMAs.
        in_specs=[vmem_spec] * 5,
        out_specs=vmem_spec,
        scratch_shapes=[
            pltpu.VMEM((B * (Sq + Sk + Sv), D), jnp.float32),  # stacked q|k|v
            pltpu.VMEM((B * Sv, D), jnp.float32),              # attention out
        ],
    )(q2d, k2d, v2d, w_pack, b_pack)

    return out2d.reshape(B, Sv, n_output)


def init_params(key, *, n_hidden_RNN, d_model, n_output):
    """Raw parameters mirroring the PyTorch nn.Linear init (cross_last=True)."""
    ks = jax.random.split(key, 8)

    def lin(wk, bk, fan_in, fan_out):
        bound = 1.0 / math.sqrt(fan_in)
        w = jax.random.uniform(wk, (fan_in, fan_out), jnp.float32, -bound, bound)
        b = jax.random.uniform(bk, (1, fan_out), jnp.float32, -bound, bound)
        return w, b

    wq, bq = lin(ks[0], ks[1], n_hidden_RNN, d_model)
    wk, bk = lin(ks[2], ks[3], d_model, d_model)
    wv, bv = lin(ks[4], ks[5], d_model, d_model)
    wo, bo = lin(ks[6], ks[7], d_model, n_output)   # cross_last=True
    return dict(wq=wq, bq=bq, wk=wk, bk=bk, wv=wv, bv=bv, wo=wo, bo=bo)


def pack_params(params, *, num_heads):
    """ONE-TIME packing for the kernel (not in the per-call path):
    - fold 1/sqrt(head_dim) into wq/bq,
    - zero-pad wq's fan-in to d_model,
    - concatenate [wq_pad | wk | wv | wo] and [bq | bk | bv | bo]."""
    d_model = params["wk"].shape[0]
    n_hidden = params["wq"].shape[0]
    assert n_hidden <= d_model, "packing assumes n_hidden_RNN <= d_model"
    inv_scale = 1.0 / math.sqrt(d_model // num_heads)

    wq_p = jnp.pad(params["wq"] * inv_scale, ((0, d_model - n_hidden), (0, 0)))
    bq_p = params["bq"] * inv_scale
    w_pack = jnp.concatenate([wq_p, params["wk"], params["wv"], params["wo"]],
                             axis=1)                       # (D, 3D + n_output)
    b_pack = jnp.concatenate([bq_p, params["bk"], params["bv"], params["bo"]],
                             axis=1)                       # (1, 3D + n_output)
    return w_pack, b_pack


def spiking_mha_reference(query, key, value, params, *, num_heads):
    """Pure-JAX reference mirroring the PyTorch forward exactly."""
    D = params["wk"].shape[0]
    scale = math.sqrt(D // num_heads)
    q = query @ params["wq"] + params["bq"][0]
    k = key @ params["wk"] + params["bk"][0]
    v = value @ params["wv"] + params["bv"][0]
    scores = jnp.einsum("bsi,bsj->bij", q, k) / scale
    probs = jax.nn.softmax(scores, axis=-1)
    out = jnp.einsum("bij,btj->bti", probs, v)
    return out @ params["wo"] + params["bo"][0]


if __name__ == "__main__":
    # Small shapes consistent with the module's forward.
    B, S = 2, 8                  # batch, sequence (query/key/value share S)
    n_hidden_RNN = 24            # q_proj input features
    d_model = 32
    num_heads = 4                # head_dim = 8, scale = sqrt(8)
    n_output = 16

    root = jax.random.PRNGKey(0)
    k_q, k_k, k_v, k_p = jax.random.split(root, 4)
    query = jax.random.normal(k_q, (B, S, n_hidden_RNN), jnp.float32)
    key = jax.random.normal(k_k, (B, S, d_model), jnp.float32)
    value = jax.random.normal(k_v, (B, S, d_model), jnp.float32)

    params = init_params(k_p, n_hidden_RNN=n_hidden_RNN, d_model=d_model,
                         n_output=n_output)
    w_pack, b_pack = pack_params(params, num_heads=num_heads)   # once, at init

    out = spiking_mha_pallas(query, key, value, w_pack, b_pack)
    out = jax.block_until_ready(out)

    ref = spiking_mha_reference(query, key, value, params, num_heads=num_heads)
    assert out.shape == (B, S, n_output), out.shape
    assert jnp.allclose(out, ref, rtol=1e-4, atol=1e-4), "mismatch vs reference"

    print("KERNEL_OK")
</pallas_src>

<mosaic_0001>
module attributes {stable_mosaic.version = 11 : i64} {
  func.func @smha_kernel(%arg0: memref<16x24xf32, #tpu.memory_space<vmem>>, %arg1: memref<16x32xf32, #tpu.memory_space<vmem>>, %arg2: memref<16x32xf32, #tpu.memory_space<vmem>>, %arg3: memref<32x112xf32, #tpu.memory_space<vmem>>, %arg4: memref<1x112xf32, #tpu.memory_space<vmem>>, %arg5: memref<16x16xf32, #tpu.memory_space<vmem>>, %arg6: memref<48x32xf32, #tpu.memory_space<vmem>>, %arg7: memref<16x32xf32, #tpu.memory_space<vmem>>) attributes {dimension_semantics = [], scalar_prefetch = 0 : i64, scratch_operands = 2 : i64, tpu.core_type = #tpu.core_type<tc>} {
    %cst = arith.constant 0.000000e+00 : f32
    %0 = vector.broadcast %cst : f32 to vector<48x32xf32>
    %c0 = arith.constant 0 : index
    %c0_0 = arith.constant 0 : index
    %1 = vector.load %arg6[%c0, %c0_0] : memref<48x32xf32, #tpu.memory_space<vmem>>, vector<48x32xf32>
    tpu.vector_store %arg6[%c0, %c0_0], %0 {strides = array<i32>} : memref<48x32xf32, #tpu.memory_space<vmem>>, vector<48x32xf32>,
    %c0_1 = arith.constant 0 : index
    %c0_2 = arith.constant 0 : index
    %2 = vector.load %arg0[%c0_1, %c0_2] : memref<16x24xf32, #tpu.memory_space<vmem>>, vector<16x24xf32>
    %c0_3 = arith.constant 0 : index
    %c0_4 = arith.constant 0 : index
    %3 = vector.load %arg6[%c0_3, %c0_4] : memref<48x32xf32, #tpu.memory_space<vmem>>, vector<16x24xf32>
    tpu.vector_store %arg6[%c0_3, %c0_4], %2 {strides = array<i32>} : memref<48x32xf32, #tpu.memory_space<vmem>>, vector<16x24xf32>,
    %c0_5 = arith.constant 0 : index
    %c0_6 = arith.constant 0 : index
    %4 = vector.load %arg1[%c0_5, %c0_6] : memref<16x32xf32, #tpu.memory_space<vmem>>, vector<16x32xf32>
    %c16 = arith.constant 16 : index
    %c0_7 = arith.constant 0 : index
    %5 = vector.load %arg6[%c16, %c0_7] : memref<48x32xf32, #tpu.memory_space<vmem>>, vector<16x32xf32>
    tpu.vector_store %arg6[%c16, %c0_7], %4 {strides = array<i32>} : memref<48x32xf32, #tpu.memory_space<vmem>>, vector<16x32xf32>,
    %c0_8 = arith.constant 0 : index
    %c0_9 = arith.constant 0 : index
    %6 = vector.load %arg2[%c0_8, %c0_9] : memref<16x32xf32, #tpu.memory_space<vmem>>, vector<16x32xf32>
    %c32 = arith.constant 32 : index
    %c0_10 = arith.constant 0 : index
    %7 = vector.load %arg6[%c32, %c0_10] : memref<48x32xf32, #tpu.memory_space<vmem>>, vector<16x32xf32>
    tpu.vector_store %arg6[%c32, %c0_10], %6 {strides = array<i32>} : memref<48x32xf32, #tpu.memory_space<vmem>>, vector<16x32xf32>,
    %c0_11 = arith.constant 0 : index
    %c0_12 = arith.constant 0 : index
    %8 = vector.load %arg6[%c0_11, %c0_12] : memref<48x32xf32, #tpu.memory_space<vmem>>, vector<48x32xf32>
    %c0_13 = arith.constant 0 : index
    %c0_14 = arith.constant 0 : index
    %9 = vector.load %arg3[%c0_13, %c0_14] : memref<32x112xf32, #tpu.memory_space<vmem>>, vector<32x96xf32>
    %cst_15 = arith.constant dense<0.000000e+00> : vector<48x96xf32>
    %10 = tpu.matmul %8, %9, %cst_15 {dimension_numbers = #tpu.dot_dimension_numbers<[1], [0], [0], [1], [0, 0, 1, 1], [], []>} : vector<48x32xf32>, vector<32x96xf32>, vector<48x96xf32> -> vector<48x96xf32>
    %c0_16 = arith.constant 0 : index
    %c0_17 = arith.constant 0 : index
    %11 = vector.load %arg4[%c0_16, %c0_17] : memref<1x112xf32, #tpu.memory_space<vmem>>, vector<1x96xf32>
    %12 = vector.broadcast %11 : vector<1x96xf32> to vector<48x96xf32>
    %13 = arith.addf %10, %12 : vector<48x96xf32>
    %14 = vector.extract_strided_slice %13 {offsets = [0, 0], sizes = [16, 32], strides = [1, 1]} : vector<48x96xf32> to vector<16x32xf32>
    %15 = vector.extract_strided_slice %13 {offsets = [16, 32], sizes = [16, 32], strides = [1, 1]} : vector<48x96xf32> to vector<16x32xf32>
    %16 = vector.extract_strided_slice %13 {offsets = [32, 64], sizes = [16, 32], strides = [1, 1]} : vector<48x96xf32> to vector<16x32xf32>
    %17 = vector.extract_strided_slice %14 {offsets = [0, 0], sizes = [8, 32], strides = [1, 1]} : vector<16x32xf32> to vector<8x32xf32>
    %18 = vector.extract_strided_slice %15 {offsets = [0, 0], sizes = [8, 32], strides = [1, 1]} : vector<16x32xf32> to vector<8x32xf32>
    %19 = vector.extract_strided_slice %16 {offsets = [0, 0], sizes = [8, 32], strides = [1, 1]} : vector<16x32xf32> to vector<8x32xf32>
    %cst_18 = arith.constant dense<0.000000e+00> : vector<32x32xf32>
    %20 = tpu.matmul %17, %18, %cst_18 {dimension_numbers = #tpu.dot_dimension_numbers<[0], [0], [1], [1], [0, 1, 1, 1], [], []>} : vector<8x32xf32>, vector<8x32xf32>, vector<32x32xf32> -> vector<32x32xf32>
    %cst_19 = arith.constant dense<0xFF800000> : vector<32xf32>
    %21 = vector.multi_reduction <maximumf>, %20, %cst_19 [1] : vector<32x32xf32> to vector<32xf32>
    %22 = vector.shape_cast %21 : vector<32xf32> to vector<32x1xf32>
    %23 = vector.broadcast %22 : vector<32x1xf32> to vector<32x32xf32>
    %24 = arith.subf %20, %23 : vector<32x32xf32>
    %25 = math.exp %24 : vector<32x32xf32>
    %cst_20 = arith.constant dense<0.000000e+00> : vector<32xf32>
    %26 = vector.multi_reduction <add>, %25, %cst_20 [1] : vector<32x32xf32> to vector<32xf32>
    %27 = vector.shape_cast %26 : vector<32xf32> to vector<32x1xf32>
    %28 = vector.broadcast %27 : vector<32x1xf32> to vector<32x32xf32>
    %29 = arith.divf %25, %28 : vector<32x32xf32>
    %cst_21 = arith.constant dense<0.000000e+00> : vector<8x32xf32>
    %30 = tpu.matmul %19, %29, %cst_21 {dimension_numbers = #tpu.dot_dimension_numbers<[1], [1], [0], [0], [0, 0, 1, 0], [], []>} : vector<8x32xf32>, vector<32x32xf32>, vector<8x32xf32> -> vector<8x32xf32>
    %c0_22 = arith.constant 0 : index
    %c0_23 = arith.constant 0 : index
    %31 = vector.load %arg7[%c0_22, %c0_23] : memref<16x32xf32, #tpu.memory_space<vmem>>, vector<8x32xf32>
    tpu.vector_store %arg7[%c0_22, %c0_23], %30 {strides = array<i32>} : memref<16x32xf32, #tpu.memory_space<vmem>>, vector<8x32xf32>,
    %32 = vector.extract_strided_slice %14 {offsets = [8, 0], sizes = [8, 32], strides = [1, 1]} : vector<16x32xf32> to vector<8x32xf32>
    %33 = vector.extract_strided_slice %15 {offsets = [8, 0], sizes = [8, 32], strides = [1, 1]} : vector<16x32xf32> to vector<8x32xf32>
    %34 = vector.extract_strided_slice %16 {offsets = [8, 0], sizes = [8, 32], strides = [1, 1]} : vector<16x32xf32> to vector<8x32xf32>
    %cst_24 = arith.constant dense<0.000000e+00> : vector<32x32xf32>
    %35 = tpu.matmul %32, %33, %cst_24 {dimension_numbers = #tpu.dot_dimension_numbers<[0], [0], [1], [1], [0, 1, 1, 1], [], []>} : vector<8x32xf32>, vector<8x32xf32>, vector<32x32xf32> -> vector<32x32xf32>
    %cst_25 = arith.constant dense<0xFF800000> : vector<32xf32>
    %36 = vector.multi_reduction <maximumf>, %35, %cst_25 [1] : vector<32x32xf32> to vector<32xf32>
    %37 = vector.shape_cast %36 : vector<32xf32> to vector<32x1xf32>
    %38 = vector.broadcast %37 : vector<32x1xf32> to vector<32x32xf32>
    %39 = arith.subf %35, %38 : vector<32x32xf32>
    %40 = math.exp %39 : vector<32x32xf32>
    %cst_26 = arith.constant dense<0.000000e+00> : vector<32xf32>
    %41 = vector.multi_reduction <add>, %40, %cst_26 [1] : vector<32x32xf32> to vector<32xf32>
    %42 = vector.shape_cast %41 : vector<32xf32> to vector<32x1xf32>
    %43 = vector.broadcast %42 : vector<32x1xf32> to vector<32x32xf32>
    %44 = arith.divf %40, %43 : vector<32x32xf32>
    %cst_27 = arith.constant dense<0.000000e+00> : vector<8x32xf32>
    %45 = tpu.matmul %34, %44, %cst_27 {dimension_numbers = #tpu.dot_dimension_numbers<[1], [1], [0], [0], [0, 0, 1, 0], [], []>} : vector<8x32xf32>, vector<32x32xf32>, vector<8x32xf32> -> vector<8x32xf32>
    %c8 = arith.constant 8 : index
    %c0_28 = arith.constant 0 : index
    %46 = vector.load %arg7[%c8, %c0_28] : memref<16x32xf32, #tpu.memory_space<vmem>>, vector<8x32xf32>
    tpu.vector_store %arg7[%c8, %c0_28], %45 {strides = array<i32>} : memref<16x32xf32, #tpu.memory_space<vmem>>, vector<8x32xf32>,
    %c0_29 = arith.constant 0 : index
    %c0_30 = arith.constant 0 : index
    %47 = vector.load %arg7[%c0_29, %c0_30] : memref<16x32xf32, #tpu.memory_space<vmem>>, vector<16x32xf32>
    %c0_31 = arith.constant 0 : index
    %c96 = arith.constant 96 : index
    %48 = vector.load %arg3[%c0_31, %c96] : memref<32x112xf32, #tpu.memory_space<vmem>>, vector<32x16xf32>
    %cst_32 = arith.constant dense<0.000000e+00> : vector<16x16xf32>
    %49 = tpu.matmul %47, %48, %cst_32 {dimension_numbers = #tpu.dot_dimension_numbers<[1], [0], [0], [1], [0, 0, 1, 1], [], []>} : vector<16x32xf32>, vector<32x16xf32>, vector<16x16xf32> -> vector<16x16xf32>
    %c0_33 = arith.constant 0 : index
    %c96_34 = arith.constant 96 : index
    %50 = vector.load %arg4[%c0_33, %c96_34] : memref<1x112xf32, #tpu.memory_space<vmem>>, vector<1x16xf32>
    %51 = vector.broadcast %50 : vector<1x16xf32> to vector<16x16xf32>
    %52 = arith.addf %49, %51 : vector<16x16xf32>
    %c0_35 = arith.constant 0 : index
    %c0_36 = arith.constant 0 : index
    %53 = vector.load %arg5[%c0_35, %c0_36] : memref<16x16xf32, #tpu.memory_space<vmem>>, vector<16x16xf32>
    tpu.vector_store %arg5[%c0_35, %c0_36], %52 {strides = array<i32>} : memref<16x16xf32, #tpu.memory_space<vmem>>, vector<16x16xf32>,
    return
  }
}

</mosaic_0001>

<llo_original>
// kernel: tpu_custom_call.1
$region0: #{tpu_custom_call.1}
  #allocation0 [shape = 'u32[]', space=smem, size = 0x4, offset = 0x4, fixed_abs, tag = 'smem constant byte address 0x4 - core index']
  #allocation1 [shape = 'u32[144,128]{1,0:T(1,128)}', space=vmem, size = 0x12000, scoped, tag = 'internal scratch']
  #allocation2 [shape = 'f32[48,32]{1,0:T(8,128)}', space=vmem, size = 0x6000, scoped, tag = 'scratch operand']
  #allocation3 [shape = 'f32[16,32]{1,0:T(8,128)}', space=vmem, size = 0x2000, scoped, tag = 'scratch operand']
  %s0 = inlined_call_operand.hbm [shape: f32[16,24], index: 0, kind: input, shape index: {}]
  %s1 = inlined_call_operand.hbm [shape: f32[16,32], index: 1, kind: input, shape index: {}]
  %s2 = inlined_call_operand.hbm [shape: f32[16,32], index: 2, kind: input, shape index: {}]
  %s3 = inlined_call_operand.hbm [shape: f32[32,112], index: 3, kind: input, shape index: {}]
  %s4 = inlined_call_operand.vmem [shape: f32[1,112], index: 4, kind: input, shape index: {}]
  %s5 = inlined_call_operand.hbm [shape: f32[16,16], index: 5, kind: output, shape index: {}]
  %s6 = sld [smem:[#allocation0]]
  $region46: #{tpu_custom_call.1} parent=0
    _
  %s8 = ssub.s32 1, %s6
  %s9 = scalar_select 0, %s8, %s6
  $region1: #{tpu_custom_call.1} parent=0
    #allocation4 [shape = 'u8[8192]{0}', space=vmem, size = 0x2000, scoped, tag = 'input window, operand 0, single buffered']
    #allocation5 [shape = 's32[1]{0}', space=sflag, size = 0x4, scoped, tag = 'scoped memory for tpu_custom_call.1']
    #allocation6 [shape = 's32[1]{0}', space=sflag, size = 0x4, scoped, tag = 'scoped memory for tpu_custom_call.1']
    #allocation7 [shape = 'u8[8192]{0}', space=vmem, size = 0x2000, scoped, tag = 'input window, operand 1, single buffered']
    #allocation8 [shape = 's32[1]{0}', space=sflag, size = 0x4, scoped, tag = 'scoped memory for tpu_custom_call.1']
    #allocation9 [shape = 'u8[8192]{0}', space=vmem, size = 0x2000, scoped, tag = 'input window, operand 2, single buffered']
    #allocation10 [shape = 'u8[16384]{0}', space=vmem, size = 0x4000, scoped, tag = 'input window, operand 3, single buffered']
    #allocation11 [shape = 's32[1]{0}', space=sflag, size = 0x4, scoped, tag = 'scoped memory for tpu_custom_call.1']
    #allocation12 [shape = 'u8[8192]{0}', space=vmem, size = 0x2000, scoped, tag = 'output window, operand 0, single buffered']
    %10 = vsyncpa [#allocation5], 0
    %11 = vsyncpa [#allocation8], 0
    %12 = vsyncpa [#allocation11], 0
    %13 = vsyncpa [#allocation6], 0
    // Predicated region
    $region2: #{tpu_custom_call.1} parent=1 // pred_check
      _
    $region3: #{tpu_custom_call.1} parent=1 // pred_check_branch
      %15 = sbr.rel (0) target = $region5
    $region4: #{tpu_custom_call.1} parent=1 // pred_region
      %s17 = ssub.s32 256, 256
      %18 = vsyncadd [#allocation5], %s17
      %s19 = sshll.u32 [#allocation4], 4
      %s20 = int_to_ptr.vmem [resolvable:$true] %s19
      %25 = dma.hbm_to_vmem [thread:$0]  %s0, 256, %s20, [#allocation5], 128, 128, 8
    $region5: #{tpu_custom_call.1} parent=1 // pred_fallthru
      _
    // Predicated region
    $region6: #{tpu_custom_call.1} parent=1 // pred_check
      _
    $region7: #{tpu_custom_call.1} parent=1 // pred_check_branch
      %27 = sbr.rel (0) target = $region9
    $region8: #{tpu_custom_call.1} parent=1 // pred_region
      %s29 = ssub.s32 256, 256
      %30 = vsyncadd [#allocation8], %s29
      %s31 = sshll.u32 [#allocation7], 4
      %s32 = int_to_ptr.vmem [resolvable:$true] %s31
      %37 = dma.hbm_to_vmem [thread:$0]  %s1, 256, %s32, [#allocation8], 128, 128, 8
    $region9: #{tpu_custom_call.1} parent=1 // pred_fallthru
      _
    // Predicated region
    $region10: #{tpu_custom_call.1} parent=1 // pred_check
      _
    $region11: #{tpu_custom_call.1} parent=1 // pred_check_branch
      %39 = sbr.rel (0) target = $region13
    $region12: #{tpu_custom_call.1} parent=1 // pred_region
      %s41 = ssub.s32 256, 256
      %42 = vsyncadd [#allocation8], %s41
      %s43 = sshll.u32 [#allocation9], 4
      %s44 = int_to_ptr.vmem [resolvable:$true] %s43
      %49 = dma.hbm_to_vmem [thread:$0]  %s2, 256, %s44, [#allocation8], 128, 128, 8
    $region13: #{tpu_custom_call.1} parent=1 // pred_fallthru
      _
    // Predicated region
    $region14: #{tpu_custom_call.1} parent=1 // pred_check
      _
    $region15: #{tpu_custom_call.1} parent=1 // pred_check_branch
      %51 = sbr.rel (0) target = $region17
    $region16: #{tpu_custom_call.1} parent=1 // pred_region
      %s53 = ssub.s32 512, 512
      %54 = vsyncadd [#allocation11], %s53
      %s55 = sshll.u32 [#allocation10], 4
      %s56 = int_to_ptr.vmem [resolvable:$true] %s55
      %61 = dma.hbm_to_vmem [thread:$0]  %s3, 512, %s56, [#allocation11], 128, 128, 8
    $region17: #{tpu_custom_call.1} parent=1 // pred_fallthru
      _
    // Predicated region
    $region18: #{tpu_custom_call.1} parent=1 // pred_check
      _
    $region19: #{tpu_custom_call.1} parent=1 // pred_check_branch
      %63 = sbr.rel (0) target = $region21
    $region20: #{tpu_custom_call.1} parent=1 // pred_region
      _
    $region21: #{tpu_custom_call.1} parent=1 // pred_fallthru
      _
    // Predicated region
    $region22: #{tpu_custom_call.1} parent=1 // pred_check
      _
    $region23: #{tpu_custom_call.1} parent=1 // pred_check_branch
      %65 = sbr.rel (0) target = $region25
    $region24: #{tpu_custom_call.1} parent=1 // pred_region
      %66 = dma.done [#allocation5], 256
    $region25: #{tpu_custom_call.1} parent=1 // pred_fallthru
      _
    // Predicated region
    $region26: #{tpu_custom_call.1} parent=1 // pred_check
      _
    $region27: #{tpu_custom_call.1} parent=1 // pred_check_branch
      %68 = sbr.rel (0) target = $region29
    $region28: #{tpu_custom_call.1} parent=1 // pred_region
      %69 = dma.done [#allocation8], 256
    $region29: #{tpu_custom_call.1} parent=1 // pred_fallthru
      _
    // Predicated region
    $region30: #{tpu_custom_call.1} parent=1 // pred_check
      _
    $region31: #{tpu_custom_call.1} parent=1 // pred_check_branch
      %71 = sbr.rel (0) target = $region33
    $region32: #{tpu_custom_call.1} parent=1 // pred_region
      %72 = dma.done [#allocation8], 256
    $region33: #{tpu_custom_call.1} parent=1 // pred_fallthru
      _
    // Predicated region
    $region34: #{tpu_custom_call.1} parent=1 // pred_check
      _
    $region35: #{tpu_custom_call.1} parent=1 // pred_check_branch
      %74 = sbr.rel (0) target = $region37
    $region36: #{tpu_custom_call.1} parent=1 // pred_region
      %75 = dma.done [#allocation11], 512
    $region37: #{tpu_custom_call.1} parent=1 // pred_fallthru
      _
    %vm76 = vcmask 261120
    %77 = vst.msk [vmem:[#allocation2] sm:$0xff] %vm76, 0.0
    %78 = vst.msk [vmem:[#allocation2 + $0x8] sm:$0xff] %vm76, 0.0
    %79 = vst.msk [vmem:[#allocation2 + $0x10] sm:$0xff] %vm76, 0.0
    %80 = vst.msk [vmem:[#allocation2 + $0x18] sm:$0xff] %vm76, 0.0
    %81 = vst.msk [vmem:[#allocation2 + $0x20] sm:$0xff] %vm76, 0.0
    %82 = vst.msk [vmem:[#allocation2 + $0x28] sm:$0xff] %vm76, 0.0
    %v83 = vld [vmem:[#allocation4] sm:$0xff]
    %v84 = vld [vmem:[#allocation4 + $0x8] sm:$0xff]
    %vm85 = vcmask 195584
    %86 = vst.msk [vmem:[#allocation2] sm:$0xff] %vm85, %v83
    %87 = vst.msk [vmem:[#allocation2 + $0x8] sm:$0xff] %vm85, %v84
    %v88 = vld [vmem:[#allocation7] sm:$0xff]
    %v89 = vld [vmem:[#allocation7 + $0x8] sm:$0xff]
    %90 = vst.msk [vmem:[#allocation2 + $0x10] sm:$0xff] %vm76, %v88
    %91 = vst.msk [vmem:[#allocation2 + $0x18] sm:$0xff] %vm76, %v89
    %v92 = vld [vmem:[#allocation9] sm:$0xff]
    %v93 = vld [vmem:[#allocation9 + $0x8] sm:$0xff]
    %94 = vst.msk [vmem:[#allocation2 + $0x20] sm:$0xff] %vm76, %v92
    %95 = vst.msk [vmem:[#allocation2 + $0x28] sm:$0xff] %vm76, %v93
    %v96 = vld [vmem:[#allocation2] sm:$0xff]
    %v97 = vld [vmem:[#allocation2 + $0x8] sm:$0xff]
    %v98 = vld [vmem:[#allocation2 + $0x10] sm:$0xff]
    %v99 = vld [vmem:[#allocation2 + $0x18] sm:$0xff]
    %v100 = vld [vmem:[#allocation2 + $0x20] sm:$0xff]
    %v101 = vld [vmem:[#allocation2 + $0x28] sm:$0xff]
    %v102 = vld [vmem:[#allocation10] sm:$0xff]
    %v103 = vld [vmem:[#allocation10 + $0x8] sm:$0xff]
    %v104 = vld [vmem:[#allocation10 + $0x10] sm:$0xff]
    %v105 = vld [vmem:[#allocation10 + $0x18] sm:$0xff]
    %v106 = vld [vmem:[%s4] sm:$0x1]
    %v108 = vlaneseq
    %v109 = vshrl.u32 %v108, 7
    %v110 = vsub.s32 0, %v109
    %v111 = vrot.slane %v106, %v110
    %v114 = vsel %vm76, %v96, 0
    %v117 = vsel %vm76, %v97, 0
    %v120 = vsel %vm76, %v98, 0
    %v123 = vsel %vm76, %v99, 0
    %v126 = vsel %vm76, %v100, 0
    %v129 = vsel %vm76, %v101, 0
    %131 = vmatprep.subr.mxu0 0.0
    %132 = vmatpush1.msra.mxu0 %v102
    %133 = vmatprep.subr.mxu0 0.0
    %134 = vmatpush1.msra.mxu0 %v103
    %135 = vmatprep.subr.mxu0 0.0
    %136 = vmatpush1.msra.mxu0 %v104
    %137 = vmatprep.subr.mxu0 0.0
    %138 = vmatpush1.msra.mxu0 %v105
    %139 = vmatprep.subr.mxu0 0.0
    %140 = vmatpush1.msra.mxu0 0.0
    %141 = vmatprep.subr.mxu0 0.0
    %142 = vmatpush1.msra.mxu0 0.0
    %143 = vmatprep.subr.mxu0 0.0
    %144 = vmatpush1.msra.mxu0 0.0
    %145 = vmatprep.subr.mxu0 0.0
    %146 = vmatpush1.msra.mxu0 0.0
    %147 = vmatprep.subr.mxu0 0.0
    %148 = vmatpush1.msra.mxu0 0.0
    %149 = vmatprep.subr.mxu0 0.0
    %150 = vmatpush1.msra.mxu0 0.0
    %151 = vmatprep.subr.mxu0 0.0
    %152 = vmatpush1.msra.mxu0 0.0
    %153 = vmatprep.subr.mxu0 0.0
    %154 = vmatpush1.msra.mxu0 0.0
    %155 = vmatprep.subr.mxu0 0.0
    %156 = vmatpush1.msra.mxu0 0.0
    %157 = vmatprep.subr.mxu0 0.0
    %158 = vmatpush1.msra.mxu0 0.0
    %159 = vmatprep.subr.mxu0 0.0
    %160 = vmatpush1.msra.mxu0 0.0
    %161 = vmatprep.subr.mxu0 0.0
    %162 = vmatpush1.msra.mxu0 0.0
    %163 = vmatprep.subr.mxu0 0.0
    %164 = vmatpush1.msra.mxu0 0.0
    %165 = vmatprep.subr.mxu0 0.0
    %166 = vmatpush1.msra.mxu0 0.0
    %167 = vmatprep.subr.mxu0 0.0
    %168 = vmatpush1.msra.mxu0 0.0
    %169 = vmatprep.subr.mxu0 0.0
    %170 = vmatpush1.msra.mxu0 0.0
    %171 = vmatprep.subr.mxu0 0.0
    %172 = vmatpush1.msra.mxu0 0.0
    %173 = vmatprep.subr.mxu0 0.0
    %174 = vmatpush1.msra.mxu0 0.0
    %175 = vmatprep.subr.mxu0 0.0
    %176 = vmatpush1.msra.mxu0 0.0
    %177 = vmatprep.subr.mxu0 0.0
    %178 = vmatpush1.msra.mxu0 0.0
    %179 = vmatprep.subr.mxu0 0.0
    %180 = vmatpush1.msra.mxu0 0.0
    %181 = vmatprep.subr.mxu0 0.0
    %182 = vmatpush1.msra.mxu0 0.0
    %183 = vmatprep.subr.mxu0 0.0
    %184 = vmatpush1.msra.mxu0 0.0
    %185 = vmatprep.subr.mxu0 0.0
    %186 = vmatpush1.msra.mxu0 0.0
    %187 = vmatprep.subr.mxu0 0.0
    %188 = vmatpush1.msra.mxu0 0.0
    %189 = vmatprep.subr.mxu0 0.0
    %190 = vmatpush1.msra.mxu0 0.0
    %191 = vmatprep.subr.mxu0 0.0
    %192 = vmatpush1.msra.mxu0 0.0
    %193 = vmatprep.subr.mxu0 0.0
    %194 = vmatpush1.msra.mxu0 0.0
    %195 = vmatprep.mubr.f32.mxu0 0.0
    %196 = vmatmul.mubr.f32.gmra.mrb[0].mxu0 %v114
    %v197 = vpop.f32.mrb[0].mxu0
    %v198 = vadd.f32 %v111, %v197
    %v199 = vpop.f32.mrb[0].mxu0
    %200 = vmatprep.mubr.f32.mxu0 0.0
    %201 = vmatmul.mubr.f32.gmra.mrb[0].mxu0 %v117
    %v202 = vpop.f32.mrb[0].mxu0
    %v203 = vadd.f32 %v111, %v202
    %v204 = vpop.f32.mrb[0].mxu0
    %205 = vmatprep.mubr.f32.mxu0 0.0
    %206 = vmatmul.mubr.f32.gmra.mrb[0].mxu0 %v120
    %v207 = vpop.f32.mrb[0].mxu0
    %v208 = vadd.f32 %v111, %v207
    %v209 = vpop.f32.mrb[0].mxu0
    %210 = vmatprep.mubr.f32.mxu0 0.0
    %211 = vmatmul.mubr.f32.gmra.mrb[0].mxu0 %v123
    %v212 = vpop.f32.mrb[0].mxu0
    %v213 = vadd.f32 %v111, %v212
    %v214 = vpop.f32.mrb[0].mxu0
    %215 = vmatprep.mubr.f32.mxu0 0.0
    %216 = vmatmul.mubr.f32.gmra.mrb[0].mxu0 %v126
    %v217 = vpop.f32.mrb[0].mxu0
    %v218 = vadd.f32 %v111, %v217
    %v219 = vpop.f32.mrb[0].mxu0
    %220 = vmatprep.mubr.f32.mxu0 0.0
    %221 = vmatmul.mubr.f32.gmra.mrb[0].mxu0 %v129
    %v222 = vpop.f32.mrb[0].mxu0
    %v223 = vadd.f32 %v111, %v222
    %v224 = vpop.f32.mrb[0].mxu0
    %225 = vdwg.mxu0
    %226 = vxpose.xlu0.b32.start [1/16] %v198, 128
    %227 = vxpose.xlu0.b32.cont [2/16] 0.0, 128
    %228 = vxpose.xlu0.b32.cont [3/16] 0.0, 128
    %229 = vxpose.xlu0.b32.cont [4/16] 0.0, 128
    %230 = vxpose.xlu0.b32.cont [5/16] 0.0, 128
    %231 = vxpose.xlu0.b32.cont [6/16] 0.0, 128
    %232 = vxpose.xlu0.b32.cont [7/16] 0.0, 128
    %233 = vxpose.xlu0.b32.cont [8/16] 0.0, 128
    %234 = vxpose.xlu0.b32.cont [9/16] 0.0, 128
    %235 = vxpose.xlu0.b32.cont [10/16] 0.0, 128
    %236 = vxpose.xlu0.b32.cont [11/16] 0.0, 128
    %237 = vxpose.xlu0.b32.cont [12/16] 0.0, 128
    %238 = vxpose.xlu0.b32.cont [13/16] 0.0, 128
    %239 = vxpose.xlu0.b32.cont [14/16] 0.0, 128
    %240 = vxpose.xlu0.b32.cont [15/16] 0.0, 128
    %241 = vxpose.xlu0.b32.end [16/16] 0.0, 128
    %v242 = vpop.trf.xlu0
    %v243 = vpop.trf.xlu0
    %v244 = vpop.trf.xlu0
    %v245 = vpop.trf.xlu0
    %v246 = vpop.trf.xlu0
    %v247 = vpop.trf.xlu0
    %v248 = vpop.trf.xlu0
    %v249 = vpop.trf.xlu0
    %v250 = vpop.trf.xlu0
    %v251 = vpop.trf.xlu0
    %v252 = vpop.trf.xlu0
    %v253 = vpop.trf.xlu0
    %v254 = vpop.trf.xlu0
    %v255 = vpop.trf.xlu0
    %v256 = vpop.trf.xlu0
    %v257 = vpop.trf.xlu0
    %259 = vrot.lane.b32.xlu0 %v208, 96
    %v260 = vpop.permute.xlu0 %259
    %vm262 = vcmask 64512
    %v264 = vsel %vm262, %v242, 0
    %v267 = vsel %vm262, %v243, 0
    %v270 = vsel %vm262, %v244, 0
    %v273 = vsel %vm262, %v245, 0
    %275 = vmatprep.subr.mxu0 0.0
    %276 = vmatpush1.msra.mxu0 %v260
    %277 = vmatprep.subr.mxu0 0.0
    %278 = vmatpush1.msra.mxu0 0.0
    %279 = vmatprep.subr.mxu0 0.0
    %280 = vmatpush1.msra.mxu0 0.0
    %281 = vmatprep.subr.mxu0 0.0
    %282 = vmatpush1.msra.mxu0 0.0
    %283 = vmatprep.subr.mxu0 0.0
    %284 = vmatpush1.msra.mxu0 0.0
    %285 = vmatprep.subr.mxu0 0.0
    %286 = vmatpush1.msra.mxu0 0.0
    %287 = vmatprep.subr.mxu0 0.0
    %288 = vmatpush1.msra.mxu0 0.0
    %289 = vmatprep.subr.mxu0 0.0
    %290 = vmatpush1.msra.mxu0 0.0
    %291 = vmatprep.subr.mxu0 0.0
    %292 = vmatpush1.msra.mxu0 0.0
    %293 = vmatprep.subr.mxu0 0.0
    %294 = vmatpush1.msra.mxu0 0.0
    %295 = vmatprep.subr.mxu0 0.0
    %296 = vmatpush1.msra.mxu0 0.0
    %297 = vmatprep.subr.mxu0 0.0
    %298 = vmatpush1.msra.mxu0 0.0
    %299 = vmatprep.subr.mxu0 0.0
    %300 = vmatpush1.msra.mxu0 0.0
    %301 = vmatprep.subr.mxu0 0.0
    %302 = vmatpush1.msra.mxu0 0.0
    %303 = vmatprep.subr.mxu0 0.0
    %304 = vmatpush1.msra.mxu0 0.0
    %305 = vmatprep.subr.mxu0 0.0
    %306 = vmatpush1.msra.mxu0 0.0
    %307 = vmatprep.subr.mxu0 0.0
    %308 = vmatpush1.msra.mxu0 0.0
    %309 = vmatprep.subr.mxu0 0.0
    %310 = vmatpush1.msra.mxu0 0.0
    %311 = vmatprep.subr.mxu0 0.0
    %312 = vmatpush1.msra.mxu0 0.0
    %313 = vmatprep.subr.mxu0 0.0
    %314 = vmatpush1.msra.mxu0 0.0
    %315 = vmatprep.subr.mxu0 0.0
    %316 = vmatpush1.msra.mxu0 0.0
    %317 = vmatprep.subr.mxu0 0.0
    %318 = vmatpush1.msra.mxu0 0.0
    %319 = vmatprep.subr.mxu0 0.0
    %320 = vmatpush1.msra.mxu0 0.0
    %321 = vmatprep.subr.mxu0 0.0
    %322 = vmatpush1.msra.mxu0 0.0
    %323 = vmatprep.subr.mxu0 0.0
    %324 = vmatpush1.msra.mxu0 0.0
    %325 = vmatprep.subr.mxu0 0.0
    %326 = vmatpush1.msra.mxu0 0.0
    %327 = vmatprep.subr.mxu0 0.0
    %328 = vmatpush1.msra.mxu0 0.0
    %329 = vmatprep.subr.mxu0 0.0
    %330 = vmatpush1.msra.mxu0 0.0
    %331 = vmatprep.subr.mxu0 0.0
    %332 = vmatpush1.msra.mxu0 0.0
    %333 = vmatprep.subr.mxu0 0.0
    %334 = vmatpush1.msra.mxu0 0.0
    %335 = vmatprep.subr.mxu0 0.0
    %336 = vmatpush1.msra.mxu0 0.0
    %337 = vmatprep.subr.mxu0 0.0
    %338 = vmatpush1.msra.mxu0 0.0
    %339 = vmatprep.mubr.f32.mxu0 0.0
    %340 = vmatmul.mubr.f32.gmra.mrb[0].mxu0 %v264
    %v341 = vpop.f32.mrb[0].mxu0
    %v342 = vadd.f32 0.0, %v341
    %v343 = vpop.f32.mrb[0].mxu0
    %344 = vmatprep.mubr.f32.mxu0 0.0
    %345 = vmatmul.mubr.f32.gmra.mrb[0].mxu0 %v267
    %v346 = vpop.f32.mrb[0].mxu0
    %v347 = vadd.f32 0.0, %v346
    %v348 = vpop.f32.mrb[0].mxu0
    %349 = vmatprep.mubr.f32.mxu0 0.0
    %350 = vmatmul.mubr.f32.gmra.mrb[0].mxu0 %v270
    %v351 = vpop.f32.mrb[0].mxu0
    %v352 = vadd.f32 0.0, %v351
    %v353 = vpop.f32.mrb[0].mxu0
    %354 = vmatprep.mubr.f32.mxu0 0.0
    %355 = vmatmul.mubr.f32.gmra.mrb[0].mxu0 %v273
    %v356 = vpop.f32.mrb[0].mxu0
    %v357 = vadd.f32 0.0, %v356
    %v358 = vpop.f32.mrb[0].mxu0
    %359 = vdwg.mxu0
    %v360 = vsel %vm76, %v342, -inf
    %361 = vmax.xlane.f32.xlu0 %v360
    %v362 = vpop.xlane.xlu0 %361
    %v363 = vsel %vm76, %v347, -inf
    %364 = vmax.xlane.f32.xlu0 %v363
    %v365 = vpop.xlane.xlu0 %364
    %v366 = vsel %vm76, %v352, -inf
    %367 = vmax.xlane.f32.xlu0 %v366
    %v368 = vpop.xlane.xlu0 %367
    %v369 = vsel %vm76, %v357, -inf
    %370 = vmax.xlane.f32.xlu0 %v369
    %v371 = vpop.xlane.xlu0 %370
    %v372 = vsub.f32 %v342, %v362
    %v373 = vsub.f32 %v347, %v365
    %v374 = vsub.f32 %v352, %v368
    %v375 = vsub.f32 %v357, %v371
    %v376 = vmul.f32 %v372, 1.442695
    %v377 = vpow.pop %v376
    %v378 = vmul.f32 %v373, 1.442695
    %v379 = vpow.pop %v378
    %v380 = vmul.f32 %v374, 1.442695
    %v381 = vpow.pop %v380
    %v382 = vmul.f32 %v375, 1.442695
    %v383 = vpow.pop %v382
    %v384 = vsel %vm76, %v377, 0.0
    %385 = vadd.xlane.f32.xlu0 %v384
    %v386 = vpop.xlane.xlu0 %385
    %v387 = vsel %vm76, %v379, 0.0
    %388 = vadd.xlane.f32.xlu0 %v387
    %v389 = vpop.xlane.xlu0 %388
    %v390 = vsel %vm76, %v381, 0.0
    %391 = vadd.xlane.f32.xlu0 %v390
    %v392 = vpop.xlane.xlu0 %391
    %v393 = vsel %vm76, %v383, 0.0
    %394 = vadd.xlane.f32.xlu0 %v393
    %v395 = vpop.xlane.xlu0 %394
    %v396 = vrcp.pop %v386
    %v397 = vmul.f32 %v377, %v396
    %v398 = vrcp.pop %v389
    %v399 = vmul.f32 %v379, %v398
    %v400 = vrcp.pop %v392
    %v401 = vmul.f32 %v381, %v400
    %v402 = vrcp.pop %v395
    %v403 = vmul.f32 %v383, %v402
    %405 = vrot.lane.b32.xlu0 %v218, 64
    %v406 = vpop.permute.xlu0 %405
    %v407 = vsel %vm76, %v406, 0
    %v410 = vsel %vm76, %v397, 0
    %v413 = vsel %vm76, %v399, 0
    %v416 = vsel %vm76, %v401, 0
    %v419 = vsel %vm76, %v403, 0
    %421 = vmatprep.subr.mxu0 0.0
    %422 = vmatpush1.xpose.msra.mxu0 %v410
    %423 = vmatprep.subr.mxu0 0.0
    %424 = vmatpush1.xpose.msra.mxu0 %v413
    %425 = vmatprep.subr.mxu0 0.0
    %426 = vmatpush1.xpose.msra.mxu0 %v416
    %427 = vmatprep.subr.mxu0 0.0
    %428 = vmatpush1.xpose.msra.mxu0 %v419
    %429 = vmatprep.subr.mxu0 0.0
    %430 = vmatpush1.xpose.msra.mxu0 0.0
    %431 = vmatprep.subr.mxu0 0.0
    %432 = vmatpush1.xpose.msra.mxu0 0.0
    %433 = vmatprep.subr.mxu0 0.0
    %434 = vmatpush1.xpose.msra.mxu0 0.0
    %435 = vmatprep.subr.mxu0 0.0
    %436 = vmatpush1.xpose.msra.mxu0 0.0
    %437 = vmatprep.subr.mxu0 0.0
    %438 = vmatpush1.xpose.msra.mxu0 0.0
    %439 = vmatprep.subr.mxu0 0.0
    %440 = vmatpush1.xpose.msra.mxu0 0.0
    %441 = vmatprep.subr.mxu0 0.0
    %442 = vmatpush1.xpose.msra.mxu0 0.0
    %443 = vmatprep.subr.mxu0 0.0
    %444 = vmatpush1.xpose.msra.mxu0 0.0
    %445 = vmatprep.subr.mxu0 0.0
    %446 = vmatpush1.xpose.msra.mxu0 0.0
    %447 = vmatprep.subr.mxu0 0.0
    %448 = vmatpush1.xpose.msra.mxu0 0.0
    %449 = vmatprep.subr.mxu0 0.0
    %450 = vmatpush1.xpose.msra.mxu0 0.0
    %451 = vmatprep.subr.mxu0 0.0
    %452 = vmatpush1.xpose.msra.mxu0 0.0
    %453 = vmatprep.subr.mxu0 0.0
    %454 = vmatpush1.xpose.msra.mxu0 0.0
    %455 = vmatprep.subr.mxu0 0.0
    %456 = vmatpush1.xpose.msra.mxu0 0.0
    %457 = vmatprep.subr.mxu0 0.0
    %458 = vmatpush1.xpose.msra.mxu0 0.0
    %459 = vmatprep.subr.mxu0 0.0
    %460 = vmatpush1.xpose.msra.mxu0 0.0
    %461 = vmatprep.subr.mxu0 0.0
    %462 = vmatpush1.xpose.msra.mxu0 0.0
    %463 = vmatprep.subr.mxu0 0.0
    %464 = vmatpush1.xpose.msra.mxu0 0.0
    %465 = vmatprep.subr.mxu0 0.0
    %466 = vmatpush1.xpose.msra.mxu0 0.0
    %467 = vmatprep.subr.mxu0 0.0
    %468 = vmatpush1.xpose.msra.mxu0 0.0
    %469 = vmatprep.subr.mxu0 0.0
    %470 = vmatpush1.xpose.msra.mxu0 0.0
    %471 = vmatprep.subr.mxu0 0.0
    %472 = vmatpush1.xpose.msra.mxu0 0.0
    %473 = vmatprep.subr.mxu0 0.0
    %474 = vmatpush1.xpose.msra.mxu0 0.0
    %475 = vmatprep.subr.mxu0 0.0
    %476 = vmatpush1.xpose.msra.mxu0 0.0
    %477 = vmatprep.subr.mxu0 0.0
    %478 = vmatpush1.xpose.msra.mxu0 0.0
    %479 = vmatprep.subr.mxu0 0.0
    %480 = vmatpush1.xpose.msra.mxu0 0.0
    %481 = vmatprep.subr.mxu0 0.0
    %482 = vmatpush1.xpose.msra.mxu0 0.0
    %483 = vmatprep.subr.mxu0 0.0
    %484 = vmatpush1.xpose.msra.mxu0 0.0
    %485 = vmatprep.mubr.f32.mxu0 0.0
    %486 = vmatmul.mubr.f32.gmra.mrb[0].mxu0 %v407
    %v487 = vpop.f32.mrb[0].mxu0
    %v488 = vadd.f32 0.0, %v487
    %v489 = vpop.f32.mrb[0].mxu0
    %490 = vdwg.mxu0
    %491 = vst.msk [vmem:[#allocation3] sm:$0xff] %vm76, %v488
    %492 = vxpose.xlu0.b32.start [1/16] %v203, 128
    %493 = vxpose.xlu0.b32.cont [2/16] 0.0, 128
    %494 = vxpose.xlu0.b32.cont [3/16] 0.0, 128
    %495 = vxpose.xlu0.b32.cont [4/16] 0.0, 128
    %496 = vxpose.xlu0.b32.cont [5/16] 0.0, 128
    %497 = vxpose.xlu0.b32.cont [6/16] 0.0, 128
    %498 = vxpose.xlu0.b32.cont [7/16] 0.0, 128
    %499 = vxpose.xlu0.b32.cont [8/16] 0.0, 128
    %500 = vxpose.xlu0.b32.cont [9/16] 0.0, 128
    %501 = vxpose.xlu0.b32.cont [10/16] 0.0, 128
    %502 = vxpose.xlu0.b32.cont [11/16] 0.0, 128
    %503 = vxpose.xlu0.b32.cont [12/16] 0.0, 128
    %504 = vxpose.xlu0.b32.cont [13/16] 0.0, 128
    %505 = vxpose.xlu0.b32.cont [14/16] 0.0, 128
    %506 = vxpose.xlu0.b32.cont [15/16] 0.0, 128
    %507 = vxpose.xlu0.b32.end [16/16] 0.0, 128
    %v508 = vpop.trf.xlu0
    %v509 = vpop.trf.xlu0
    %v510 = vpop.trf.xlu0
    %v511 = vpop.trf.xlu0
    %v512 = vpop.trf.xlu0
    %v513 = vpop.trf.xlu0
    %v514 = vpop.trf.xlu0
    %v515 = vpop.trf.xlu0
    %v516 = vpop.trf.xlu0
    %v517 = vpop.trf.xlu0
    %v518 = vpop.trf.xlu0
    %v519 = vpop.trf.xlu0
    %v520 = vpop.trf.xlu0
    %v521 = vpop.trf.xlu0
    %v522 = vpop.trf.xlu0
    %v523 = vpop.trf.xlu0
    %525 = vrot.lane.b32.xlu0 %v213, 96
    %v526 = vpop.permute.xlu0 %525
    %v529 = vsel %vm262, %v508, 0
    %v532 = vsel %vm262, %v509, 0
    %v535 = vsel %vm262, %v510, 0
    %v538 = vsel %vm262, %v511, 0
    %540 = vmatprep.subr.mxu0 0.0
    %541 = vmatpush1.msra.mxu0 %v526
    %542 = vmatprep.subr.mxu0 0.0
    %543 = vmatpush1.msra.mxu0 0.0
    %544 = vmatprep.subr.mxu0 0.0
    %545 = vmatpush1.msra.mxu0 0.0
    %546 = vmatprep.subr.mxu0 0.0
    %547 = vmatpush1.msra.mxu0 0.0
    %548 = vmatprep.subr.mxu0 0.0
    %549 = vmatpush1.msra.mxu0 0.0
    %550 = vmatprep.subr.mxu0 0.0
    %551 = vmatpush1.msra.mxu0 0.0
    %552 = vmatprep.subr.mxu0 0.0
    %553 = vmatpush1.msra.mxu0 0.0
    %554 = vmatprep.subr.mxu0 0.0
    %555 = vmatpush1.msra.mxu0 0.0
    %556 = vmatprep.subr.mxu0 0.0
    %557 = vmatpush1.msra.mxu0 0.0
    %558 = vmatprep.subr.mxu0 0.0
    %559 = vmatpush1.msra.mxu0 0.0
    %560 = vmatprep.subr.mxu0 0.0
    %561 = vmatpush1.msra.mxu0 0.0
    %562 = vmatprep.subr.mxu0 0.0
    %563 = vmatpush1.msra.mxu0 0.0
    %564 = vmatprep.subr.mxu0 0.0
    %565 = vmatpush1.msra.mxu0 0.0
    %566 = vmatprep.subr.mxu0 0.0
    %567 = vmatpush1.msra.mxu0 0.0
    %568 = vmatprep.subr.mxu0 0.0
    %569 = vmatpush1.msra.mxu0 0.0
    %570 = vmatprep.subr.mxu0 0.0
    %571 = vmatpush1.msra.mxu0 0.0
    %572 = vmatprep.subr.mxu0 0.0
    %573 = vmatpush1.msra.mxu0 0.0
    %574 = vmatprep.subr.mxu0 0.0
    %575 = vmatpush1.msra.mxu0 0.0
    %576 = vmatprep.subr.mxu0 0.0
    %577 = vmatpush1.msra.mxu0 0.0
    %578 = vmatprep.subr.mxu0 0.0
    %579 = vmatpush1.msra.mxu0 0.0
    %580 = vmatprep.subr.mxu0 0.0
    %581 = vmatpush1.msra.mxu0 0.0
    %582 = vmatprep.subr.mxu0 0.0
    %583 = vmatpush1.msra.mxu0 0.0
    %584 = vmatprep.subr.mxu0 0.0
    %585 = vmatpush1.msra.mxu0 0.0
    %586 = vmatprep.subr.mxu0 0.0
    %587 = vmatpush1.msra.mxu0 0.0
    %588 = vmatprep.subr.mxu0 0.0
    %589 = vmatpush1.msra.mxu0 0.0
    %590 = vmatprep.subr.mxu0 0.0
    %591 = vmatpush1.msra.mxu0 0.0
    %592 = vmatprep.subr.mxu0 0.0
    %593 = vmatpush1.msra.mxu0 0.0
    %594 = vmatprep.subr.mxu0 0.0
    %595 = vmatpush1.msra.mxu0 0.0
    %596 = vmatprep.subr.mxu0 0.0
    %597 = vmatpush1.msra.mxu0 0.0
    %598 = vmatprep.subr.mxu0 0.0
    %599 = vmatpush1.msra.mxu0 0.0
    %600 = vmatprep.subr.mxu0 0.0
    %601 = vmatpush1.msra.mxu0 0.0
    %602 = vmatprep.subr.mxu0 0.0
    %603 = vmatpush1.msra.mxu0 0.0
    %604 = vmatprep.mubr.f32.mxu0 0.0
    %605 = vmatmul.mubr.f32.gmra.mrb[0].mxu0 %v529
    %v606 = vpop.f32.mrb[0].mxu0
    %v607 = vadd.f32 0.0, %v606
    %v608 = vpop.f32.mrb[0].mxu0
    %609 = vmatprep.mubr.f32.mxu0 0.0
    %610 = vmatmul.mubr.f32.gmra.mrb[0].mxu0 %v532
    %v611 = vpop.f32.mrb[0].mxu0
    %v612 = vadd.f32 0.0, %v611
    %v613 = vpop.f32.mrb[0].mxu0
    %614 = vmatprep.mubr.f32.mxu0 0.0
    %615 = vmatmul.mubr.f32.gmra.mrb[0].mxu0 %v535
    %v616 = vpop.f32.mrb[0].mxu0
    %v617 = vadd.f32 0.0, %v616
    %v618 = vpop.f32.mrb[0].mxu0
    %619 = vmatprep.mubr.f32.mxu0 0.0
    %620 = vmatmul.mubr.f32.gmra.mrb[0].mxu0 %v538
    %v621 = vpop.f32.mrb[0].mxu0
    %v622 = vadd.f32 0.0, %v621
    %v623 = vpop.f32.mrb[0].mxu0
    %624 = vdwg.mxu0
    %v625 = vsel %vm76, %v607, -inf
    %626 = vmax.xlane.f32.xlu0 %v625
    %v627 = vpop.xlane.xlu0 %626
    %v628 = vsel %vm76, %v612, -inf
    %629 = vmax.xlane.f32.xlu0 %v628
    %v630 = vpop.xlane.xlu0 %629
    %v631 = vsel %vm76, %v617, -inf
    %632 = vmax.xlane.f32.xlu0 %v631
    %v633 = vpop.xlane.xlu0 %632
    %v634 = vsel %vm76, %v622, -inf
    %635 = vmax.xlane.f32.xlu0 %v634
    %v636 = vpop.xlane.xlu0 %635
    %v637 = vsub.f32 %v607, %v627
    %v638 = vsub.f32 %v612, %v630
    %v639 = vsub.f32 %v617, %v633
    %v640 = vsub.f32 %v622, %v636
    %v641 = vmul.f32 %v637, 1.442695
    %v642 = vpow.pop %v641
    %v643 = vmul.f32 %v638, 1.442695
    %v644 = vpow.pop %v643
    %v645 = vmul.f32 %v639, 1.442695
    %v646 = vpow.pop %v645
    %v647 = vmul.f32 %v640, 1.442695
    %v648 = vpow.pop %v647
    %v649 = vsel %vm76, %v642, 0.0
    %650 = vadd.xlane.f32.xlu0 %v649
    %v651 = vpop.xlane.xlu0 %650
    %v652 = vsel %vm76, %v644, 0.0
    %653 = vadd.xlane.f32.xlu0 %v652
    %v654 = vpop.xlane.xlu0 %653
    %v655 = vsel %vm76, %v646, 0.0
    %656 = vadd.xlane.f32.xlu0 %v655
    %v657 = vpop.xlane.xlu0 %656
    %v658 = vsel %vm76, %v648, 0.0
    %659 = vadd.xlane.f32.xlu0 %v658
    %v660 = vpop.xlane.xlu0 %659
    %v661 = vrcp.pop %v651
    %v662 = vmul.f32 %v642, %v661
    %v663 = vrcp.pop %v654
    %v664 = vmul.f32 %v644, %v663
    %v665 = vrcp.pop %v657
    %v666 = vmul.f32 %v646, %v665
    %v667 = vrcp.pop %v660
    %v668 = vmul.f32 %v648, %v667
    %670 = vrot.lane.b32.xlu0 %v223, 64
    %v671 = vpop.permute.xlu0 %670
    %v672 = vsel %vm76, %v671, 0
    %v675 = vsel %vm76, %v662, 0
    %v678 = vsel %vm76, %v664, 0
    %v681 = vsel %vm76, %v666, 0
    %v684 = vsel %vm76, %v668, 0
    %686 = vmatprep.subr.mxu0 0.0
    %687 = vmatpush1.xpose.msra.mxu0 %v675
    %688 = vmatprep.subr.mxu0 0.0
    %689 = vmatpush1.xpose.msra.mxu0 %v678
    %690 = vmatprep.subr.mxu0 0.0
    %691 = vmatpush1.xpose.msra.mxu0 %v681
    %692 = vmatprep.subr.mxu0 0.0
    %693 = vmatpush1.xpose.msra.mxu0 %v684
    %694 = vmatprep.subr.mxu0 0.0
    %695 = vmatpush1.xpose.msra.mxu0 0.0
    %696 = vmatprep.subr.mxu0 0.0
    %697 = vmatpush1.xpose.msra.mxu0 0.0
    %698 = vmatprep.subr.mxu0 0.0
    %699 = vmatpush1.xpose.msra.mxu0 0.0
    %700 = vmatprep.subr.mxu0 0.0
    %701 = vmatpush1.xpose.msra.mxu0 0.0
    %702 = vmatprep.subr.mxu0 0.0
    %703 = vmatpush1.xpose.msra.mxu0 0.0
    %704 = vmatprep.subr.mxu0 0.0
    %705 = vmatpush1.xpose.msra.mxu0 0.0
    %706 = vmatprep.subr.mxu0 0.0
    %707 = vmatpush1.xpose.msra.mxu0 0.0
    %708 = vmatprep.subr.mxu0 0.0
    %709 = vmatpush1.xpose.msra.mxu0 0.0
    %710 = vmatprep.subr.mxu0 0.0
    %711 = vmatpush1.xpose.msra.mxu0 0.0
    %712 = vmatprep.subr.mxu0 0.0
    %713 = vmatpush1.xpose.msra.mxu0 0.0
    %714 = vmatprep.subr.mxu0 0.0
    %715 = vmatpush1.xpose.msra.mxu0 0.0
    %716 = vmatprep.subr.mxu0 0.0
    %717 = vmatpush1.xpose.msra.mxu0 0.0
    %718 = vmatprep.subr.mxu0 0.0
    %719 = vmatpush1.xpose.msra.mxu0 0.0
    %720 = vmatprep.subr.mxu0 0.0
    %721 = vmatpush1.xpose.msra.mxu0 0.0
    %722 = vmatprep.subr.mxu0 0.0
    %723 = vmatpush1.xpose.msra.mxu0 0.0
    %724 = vmatprep.subr.mxu0 0.0
    %725 = vmatpush1.xpose.msra.mxu0 0.0
    %726 = vmatprep.subr.mxu0 0.0
    %727 = vmatpush1.xpose.msra.mxu0 0.0
    %728 = vmatprep.subr.mxu0 0.0
    %729 = vmatpush1.xpose.msra.mxu0 0.0
    %730 = vmatprep.subr.mxu0 0.0
    %731 = vmatpush1.xpose.msra.mxu0 0.0
    %732 = vmatprep.subr.mxu0 0.0
    %733 = vmatpush1.xpose.msra.mxu0 0.0
    %734 = vmatprep.subr.mxu0 0.0
    %735 = vmatpush1.xpose.msra.mxu0 0.0
    %736 = vmatprep.subr.mxu0 0.0
    %737 = vmatpush1.xpose.msra.mxu0 0.0
    %738 = vmatprep.subr.mxu0 0.0
    %739 = vmatpush1.xpose.msra.mxu0 0.0
    %740 = vmatprep.subr.mxu0 0.0
    %741 = vmatpush1.xpose.msra.mxu0 0.0
    %742 = vmatprep.subr.mxu0 0.0
    %743 = vmatpush1.xpose.msra.mxu0 0.0
    %744 = vmatprep.subr.mxu0 0.0
    %745 = vmatpush1.xpose.msra.mxu0 0.0
    %746 = vmatprep.subr.mxu0 0.0
    %747 = vmatpush1.xpose.msra.mxu0 0.0
    %748 = vmatprep.subr.mxu0 0.0
    %749 = vmatpush1.xpose.msra.mxu0 0.0
    %750 = vmatprep.mubr.f32.mxu0 0.0
    %751 = vmatmul.mubr.f32.gmra.mrb[0].mxu0 %v672
    %v752 = vpop.f32.mrb[0].mxu0
    %v753 = vadd.f32 0.0, %v752
    %v754 = vpop.f32.mrb[0].mxu0
    %755 = vdwg.mxu0
    %756 = vst.msk [vmem:[#allocation3 + $0x8] sm:$0xff] %vm76, %v753
    %v757 = vld [vmem:[#allocation3] sm:$0xff]
    %v758 = vld [vmem:[#allocation3 + $0x8] sm:$0xff]
    %v759 = vld [vmem:[#allocation10] sm:$0xff]
    %v760 = vld [vmem:[#allocation10 + $0x8] sm:$0xff]
    %v761 = vld [vmem:[#allocation10 + $0x10] sm:$0xff]
    %v762 = vld [vmem:[#allocation10 + $0x18] sm:$0xff]
    %v763 = vld [vmem:[%s4] sm:$0x1]
    %v765 = vlaneseq
    %v766 = vshrl.u32 %v765, 7
    %v767 = vsub.s32 0, %v766
    %v768 = vrot.slane %v763, %v767
    %773 = vrot.lane.b32.xlu0 %v759, 32
    %v774 = vpop.permute.xlu0 %773
    %775 = vrot.lane.b32.xlu0 %v760, 32
    %v776 = vpop.permute.xlu0 %775
    %777 = vrot.lane.b32.xlu0 %v761, 32
    %v778 = vpop.permute.xlu0 %777
    %779 = vrot.lane.b32.xlu0 %v762, 32
    %v780 = vpop.permute.xlu0 %779
    %785 = vrot.lane.b32.xlu0 %v768, 32
    %v786 = vpop.permute.xlu0 %785
    %v789 = vsel %vm76, %v757, 0
    %v792 = vsel %vm76, %v758, 0
    %794 = vmatprep.subr.mxu0 0.0
    %795 = vmatpush1.msra.mxu0 %v774
    %796 = vmatprep.subr.mxu0 0.0
    %797 = vmatpush1.msra.mxu0 %v776
    %798 = vmatprep.subr.mxu0 0.0
    %799 = vmatpush1.msra.mxu0 %v778
    %800 = vmatprep.subr.mxu0 0.0
    %801 = vmatpush1.msra.mxu0 %v780
    %802 = vmatprep.subr.mxu0 0.0
    %803 = vmatpush1.msra.mxu0 0.0
    %804 = vmatprep.subr.mxu0 0.0
    %805 = vmatpush1.msra.mxu0 0.0
    %806 = vmatprep.subr.mxu0 0.0
    %807 = vmatpush1.msra.mxu0 0.0
    %808 = vmatprep.subr.mxu0 0.0
    %809 = vmatpush1.msra.mxu0 0.0
    %810 = vmatprep.subr.mxu0 0.0
    %811 = vmatpush1.msra.mxu0 0.0
    %812 = vmatprep.subr.mxu0 0.0
    %813 = vmatpush1.msra.mxu0 0.0
    %814 = vmatprep.subr.mxu0 0.0
    %815 = vmatpush1.msra.mxu0 0.0
    %816 = vmatprep.subr.mxu0 0.0
    %817 = vmatpush1.msra.mxu0 0.0
    %818 = vmatprep.subr.mxu0 0.0
    %819 = vmatpush1.msra.mxu0 0.0
    %820 = vmatprep.subr.mxu0 0.0
    %821 = vmatpush1.msra.mxu0 0.0
    %822 = vmatprep.subr.mxu0 0.0
    %823 = vmatpush1.msra.mxu0 0.0
    %824 = vmatprep.subr.mxu0 0.0
    %825 = vmatpush1.msra.mxu0 0.0
    %826 = vmatprep.subr.mxu0 0.0
    %827 = vmatpush1.msra.mxu0 0.0
    %828 = vmatprep.subr.mxu0 0.0
    %829 = vmatpush1.msra.mxu0 0.0
    %830 = vmatprep.subr.mxu0 0.0
    %831 = vmatpush1.msra.mxu0 0.0
    %832 = vmatprep.subr.mxu0 0.0
    %833 = vmatpush1.msra.mxu0 0.0
    %834 = vmatprep.subr.mxu0 0.0
    %835 = vmatpush1.msra.mxu0 0.0
    %836 = vmatprep.subr.mxu0 0.0
    %837 = vmatpush1.msra.mxu0 0.0
    %838 = vmatprep.subr.mxu0 0.0
    %839 = vmatpush1.msra.mxu0 0.0
    %840 = vmatprep.subr.mxu0 0.0
    %841 = vmatpush1.msra.mxu0 0.0
    %842 = vmatprep.subr.mxu0 0.0
    %843 = vmatpush1.msra.mxu0 0.0
    %844 = vmatprep.subr.mxu0 0.0
    %845 = vmatpush1.msra.mxu0 0.0
    %846 = vmatprep.subr.mxu0 0.0
    %847 = vmatpush1.msra.mxu0 0.0
    %848 = vmatprep.subr.mxu0 0.0
    %849 = vmatpush1.msra.mxu0 0.0
    %850 = vmatprep.subr.mxu0 0.0
    %851 = vmatpush1.msra.mxu0 0.0
    %852 = vmatprep.subr.mxu0 0.0
    %853 = vmatpush1.msra.mxu0 0.0
    %854 = vmatprep.subr.mxu0 0.0
    %855 = vmatpush1.msra.mxu0 0.0
    %856 = vmatprep.subr.mxu0 0.0
    %857 = vmatpush1.msra.mxu0 0.0
    %858 = vmatprep.mubr.f32.mxu0 0.0
    %859 = vmatmul.mubr.f32.gmra.mrb[0].mxu0 %v789
    %v860 = vpop.f32.mrb[0].mxu0
    %v861 = vadd.f32 %v786, %v860
    %v862 = vpop.f32.mrb[0].mxu0
    %863 = vmatprep.mubr.f32.mxu0 0.0
    %864 = vmatmul.mubr.f32.gmra.mrb[0].mxu0 %v792
    %v865 = vpop.f32.mrb[0].mxu0
    %v866 = vadd.f32 %v786, %v865
    %v867 = vpop.f32.mrb[0].mxu0
    %868 = vdwg.mxu0
    %vm869 = vcmask 130048
    %870 = vst.msk [vmem:[#allocation12] sm:$0xff] %vm869, %v861
    %871 = vst.msk [vmem:[#allocation12 + $0x8] sm:$0xff] %vm869, %v866
    // Predicated region
    $region38: #{tpu_custom_call.1} parent=1 // pred_check
      _
    $region39: #{tpu_custom_call.1} parent=1 // pred_check_branch
      %873 = sbr.rel (0) target = $region41
    $region40: #{tpu_custom_call.1} parent=1 // pred_region
      %s875 = ssub.s32 256, 256
      %876 = vsyncadd [#allocation6], %s875
      %s877 = sshll.u32 [#allocation12], 4
      %s878 = int_to_ptr.vmem [resolvable:$true] %s877
      %883 = dma.vmem_to_hbm [thread:$0]  %s878, 256, %s5, [#allocation6], 128, 128, 8
    $region41: #{tpu_custom_call.1} parent=1 // pred_fallthru
      _
    // Predicated region
    $region42: #{tpu_custom_call.1} parent=1 // pred_check
      _
    $region43: #{tpu_custom_call.1} parent=1 // pred_check_branch
      %885 = sbr.rel (0) target = $region45
    $region44: #{tpu_custom_call.1} parent=1 // pred_region
      %886 = dma.done [#allocation6], 256
    $region45: #{tpu_custom_call.1} parent=1 // pred_fallthru
      _
    %887 = vsyncpa [#allocation5], 1
    %888 = vsyncpa [#allocation8], 1
    %889 = vsyncpa [#allocation11], 1
    %890 = vsyncpa [#allocation6], 1

</llo_original>
